<compile_context>
chip_gen: v7x
topology: tpu7x:2x2x1
jax: 0.10.0
libtpu: 0.0.40
codegen_flags: <defaults>
</compile_context>

<pallas_src>
import functools

import jax
import jax.numpy as jnp
from jax.experimental import pallas as pl
from jax.experimental.pallas import tpu as pltpu

LANE = 128                                    # TPU lane width (last dim of every tile)
FUSED_CHANNEL_LIMIT_BYTES = 4 * 1024 * 1024   # per-channel f32 slab must fit this to fuse
FUSED_BLOCK_BUDGET_BYTES = 4 * 1024 * 1024    # target per-grid-step input block (f32 equiv)
STATS_BLOCK_BUDGET_BYTES = 2 * 1024 * 1024    # fallback pass-1 block budget
APPLY_ROWS = 4096                             # fallback pass-2 rows/step (2 MiB f32), nc-independent
VMEM_LIMIT_BYTES = 48 * 1024 * 1024           # raised scoped VMEM; safe on v5e/v6e/v7x


def _round_up(x: int, m: int) -> int:
    return ((x + m - 1) // m) * m


def _round_down(x: int, m: int) -> int:
    return (x // m) * m


# ---------------------------------------------------------------------------
# Fused single-pass kernel: stats + normalize from one VMEM-resident block.
# ---------------------------------------------------------------------------
def _fused_kernel(x_ref, o_ref, *, hw: int, need_mask: bool):
    # x_ref / o_ref: (cb, rows, LANE) block = cb whole channels.
    x = x_ref[...].astype(jnp.float32)
    cb, rows, lane = x.shape

    if need_mask:
        ridx = jax.lax.broadcasted_iota(jnp.int32, (rows, lane), 0)
        lidx = jax.lax.broadcasted_iota(jnp.int32, (rows, lane), 1)
        valid = ((ridx * lane + lidx) < hw)[None, :, :]      # (1, rows, LANE)
        xs = jnp.where(valid, x, 0.0)
    else:
        xs = x

    inv_n = jnp.float32(1.0 / hw)
    mean = jnp.sum(xs, axis=(1, 2), keepdims=True) * inv_n    # (cb, 1, 1)

    # Centered second sweep over the VMEM-resident tile (no extra HBM cost).
    d = x - mean
    if need_mask:
        d = jnp.where(valid, d, 0.0)
    bessel = 1.0 / (hw - 1) if hw > 1 else float("nan")       # torch unbiased std
    var = jnp.sum(d * d, axis=(1, 2), keepdims=True) * jnp.float32(bessel)
    inv_std = jax.lax.rsqrt(var)

    o_ref[...] = (d * inv_std).astype(o_ref.dtype)


def _normalize_fused(x3: jax.Array, hw: int) -> jax.Array:
    nc, rows, _ = x3.shape
    dt = x3.dtype
    slab_f32 = rows * LANE * 4

    # Channels per grid step: fill the byte budget, but keep >= min(nc, 4)
    # grid steps so both v7x TensorCores get work and the pipeline can overlap.
    cb_budget = max(1, FUSED_BLOCK_BUDGET_BYTES // slab_f32)
    cb_cap = max(1, nc // min(nc, 4))
    cb = max(1, min(cb_budget, cb_cap, nc))
    c_tiles = pl.cdiv(nc, cb)

    kernel = functools.partial(_fused_kernel, hw=hw, need_mask=(rows * LANE != hw))
    return pl.pallas_call(
        kernel,
        out_shape=jax.ShapeDtypeStruct((nc, rows, LANE), dt),
        grid_spec=pltpu.PrefetchScalarGridSpec(
            num_scalar_prefetch=0,
            grid=(c_tiles,),
            in_specs=[pl.BlockSpec((cb, rows, LANE), lambda c: (c, 0, 0))],
            out_specs=pl.BlockSpec((cb, rows, LANE), lambda c: (c, 0, 0)),
        ),
        compiler_params=pltpu.CompilerParams(
            dimension_semantics=("parallel",),
            vmem_limit_bytes=VMEM_LIMIT_BYTES),
    )(x3)


# ---------------------------------------------------------------------------
# Fallback (huge channels only): pass 1 = lane-wise partial sums / sum-sq.
# ---------------------------------------------------------------------------
def _stats_kernel(x_ref, sum_ref, sq_ref, *, hw: int, tr: int):
    # x_ref: (nc, tr, LANE) spatial tile of ALL channels; sum/sq: (1, nc, LANE).
    r = pl.program_id(0)
    x = x_ref[...].astype(jnp.float32)
    _, _, lane = x.shape
    ridx = jax.lax.broadcasted_iota(jnp.int32, (tr, lane), 0)
    lidx = jax.lax.broadcasted_iota(jnp.int32, (tr, lane), 1)
    idx = (r * tr + ridx) * lane + lidx
    xs = jnp.where((idx < hw)[None, :, :], x, 0.0)   # masks LANE pad AND ragged row tile
    sum_ref[0] = jnp.sum(xs, axis=1)                 # (nc, LANE)
    sq_ref[0] = jnp.sum(xs * xs, axis=1)


# Fallback pass 2: streaming (x - mean) * inv_std per channel.
def _apply_kernel(mean_ref, inv_ref, x_ref, o_ref):
    # mean_ref / inv_ref: 1-D f32[nc] in SMEM (scalar prefetch).
    c = pl.program_id(0)
    x = x_ref[...].astype(jnp.float32)               # (tr2, LANE)
    o_ref[...] = ((x - mean_ref[c]) * inv_ref[c]).astype(o_ref.dtype)


def _normalize_two_pass(x3: jax.Array, hw: int) -> jax.Array:
    nc, rows, _ = x3.shape
    dt = x3.dtype

    # ---- pass 1: partial statistics, fully parallel over spatial tiles ----
    budget_rows = STATS_BLOCK_BUDGET_BYTES // (nc * LANE * 4)
    if rows <= budget_rows:
        tr1 = rows                                    # single spatial step (full dim -> legal block)
    else:
        tr1 = max(8, _round_down(budget_rows, 8))
    r1 = pl.cdiv(rows, tr1)

    psum, psq = pl.pallas_call(
        functools.partial(_stats_kernel, hw=hw, tr=tr1),
        out_shape=(
            jax.ShapeDtypeStruct((r1, nc, LANE), jnp.float32),
            jax.ShapeDtypeStruct((r1, nc, LANE), jnp.float32),
        ),
        grid_spec=pltpu.PrefetchScalarGridSpec(
            num_scalar_prefetch=0,
            grid=(r1,),
            in_specs=[pl.BlockSpec((nc, tr1, LANE), lambda r: (0, r, 0))],
            out_specs=[
                pl.BlockSpec((1, nc, LANE), lambda r: (r, 0, 0)),
                pl.BlockSpec((1, nc, LANE), lambda r: (r, 0, 0)),
            ],
        ),
        compiler_params=pltpu.CompilerParams(
            dimension_semantics=("parallel",),
            vmem_limit_bytes=VMEM_LIMIT_BYTES),
    )(x3)

    # ---- tiny XLA finalize (negligible on this large-channel path) ----
    # Note: E[x^2]-E[x]^2 form; mild cancellation risk for large-mean/tiny-var
    # channels.  The common fused path above uses the centered formulation.
    s = jnp.sum(psum, axis=(0, 2))                    # (nc,)
    s2 = jnp.sum(psq, axis=(0, 2))                    # (nc,)
    mean = s * jnp.float32(1.0 / hw)
    bessel = 1.0 / (hw - 1) if hw > 1 else float("nan")
    var = (s2 - s * mean) * jnp.float32(bessel)
    inv_std = jax.lax.rsqrt(var)
    mean = mean.astype(jnp.float32)
    inv_std = inv_std.astype(jnp.float32)

    # ---- pass 2: normalize; row tile independent of nc (2 MiB blocks) ----
    tr2 = rows if rows <= APPLY_ROWS else APPLY_ROWS
    r2 = pl.cdiv(rows, tr2)
    out3 = pl.pallas_call(
        _apply_kernel,
        out_shape=jax.ShapeDtypeStruct((nc, rows, LANE), dt),
        grid_spec=pltpu.PrefetchScalarGridSpec(
            num_scalar_prefetch=2,
            grid=(nc, r2),
            in_specs=[pl.BlockSpec((None, tr2, LANE), lambda c, r, m, s: (c, r, 0))],
            out_specs=pl.BlockSpec((None, tr2, LANE), lambda c, r, m, s: (c, r, 0)),
        ),
        compiler_params=pltpu.CompilerParams(
            dimension_semantics=("parallel", "parallel"),
            vmem_limit_bytes=VMEM_LIMIT_BYTES),
    )(mean, inv_std, x3)
    return out3


# ---------------------------------------------------------------------------
# Wrapper
# ---------------------------------------------------------------------------
def _normalize_2d(x2d: jax.Array) -> jax.Array:
    """x2d: (NC, HW) -> each row standardized with its own mean / unbiased std."""
    nc, hw = x2d.shape
    hw_pad = _round_up(hw, LANE)
    rows = hw_pad // LANE

    # Pad at most to a LANE multiple (free when HW % 128 == 0, the common case).
    xp = x2d if hw_pad == hw else jnp.pad(x2d, ((0, 0), (0, hw_pad - hw)))
    x3 = xp.reshape(nc, rows, LANE)

    if rows * LANE * 4 <= FUSED_CHANNEL_LIMIT_BYTES:
        out3 = _normalize_fused(x3, hw)          # read-once / write-once
    else:
        out3 = _normalize_two_pass(x3, hw)       # rare: > ~1M pixels per channel

    out = out3.reshape(nc, hw_pad)
    return out if hw_pad == hw else out[:, :hw]


def normalize(img: jax.Array) -> jax.Array:
    """(C, H, W) or (B, C, H, W) -> per-channel (per-image) standardized output."""
    if img.ndim == 3:
        c, h, w = img.shape
        return _normalize_2d(img.reshape(c, h * w)).reshape(c, h, w)
    if img.ndim == 4:
        b, c, h, w = img.shape
        return _normalize_2d(img.reshape(b * c, h * w)).reshape(b, c, h, w)
    raise ValueError("expected (C, H, W) or (B, C, H, W)")


def _reference(img: jnp.ndarray) -> jnp.ndarray:
    # pure-JAX reference matching torch semantics (unbiased std)
    mean = jnp.mean(img, axis=(1, 2), keepdims=True)
    var = jnp.var(img, axis=(1, 2), keepdims=True, ddof=1)
    return (img - mean) / jnp.sqrt(var)


if __name__ == "__main__":
    # single image, CHW (what the PyTorch module sees); HW = 256 -> copy-free path
    C, H, W = 4, 16, 16
    img = jax.random.uniform(jax.random.PRNGKey(0), (C, H, W), dtype=jnp.float32)
    out = normalize(img)
    jax.block_until_ready(out)
    ref = _reference(img)
    assert out.shape == (C, H, W)
    assert jnp.allclose(out, ref, atol=1e-5, rtol=1e-5), "mismatch vs reference (single)"

    # batched path (B*C folded into one channel axis)
    imgs = jax.random.uniform(jax.random.PRNGKey(1), (2, 3, 16, 16), dtype=jnp.float32)
    outs = normalize(imgs)
    jax.block_until_ready(outs)
    refs = jax.vmap(_reference)(imgs)
    assert outs.shape == imgs.shape
    assert jnp.allclose(outs, refs, atol=1e-5, rtol=1e-5), "mismatch vs reference (batched)"

    # lane-ragged spatial size (HW = 130) exercises the in-kernel tail mask
    img_r = jax.random.uniform(jax.random.PRNGKey(2), (3, 10, 13), dtype=jnp.float32)
    out_r = normalize(img_r)
    jax.block_until_ready(out_r)
    ref_r = _reference(img_r)
    assert out_r.shape == img_r.shape
    assert jnp.allclose(out_r, ref_r, atol=1e-5, rtol=1e-5), "mismatch vs reference (ragged)"

    # exercise the large-channel two-pass fallback path on a small shape
    b, c, h, w = imgs.shape
    x3 = imgs.reshape(b * c, (h * w) // LANE, LANE)
    out_fb = _normalize_two_pass(x3, h * w).reshape(b, c, h, w)
    jax.block_until_ready(out_fb)
    assert jnp.allclose(out_fb, refs, atol=1e-4, rtol=1e-4), "mismatch vs reference (fallback)"

    print("KERNEL_OK")
</pallas_src>

<mosaic_0001>
module attributes {stable_mosaic.version = 11 : i64} {
  func.func @_fused_kernel(%arg0: i32, %arg1: memref<1x2x128xf32, #tpu.memory_space<vmem>>, %arg2: memref<1x2x128xf32, #tpu.memory_space<vmem>>) attributes {dimension_semantics = [#tpu.dimension_semantics<parallel>], iteration_bounds = array<i64: 4>, scalar_prefetch = 0 : i64, scratch_operands = 0 : i64, tpu.core_type = #tpu.core_type<tc>, window_params = [{transform_indices = @transform_0, window_bounds = array<i64: 1, 2, 128>}, {transform_indices = @transform_1, window_bounds = array<i64: 1, 2, 128>}]} {
    %c0 = arith.constant 0 : index
    %c0_0 = arith.constant 0 : index
    %c0_1 = arith.constant 0 : index
    %0 = vector.load %arg1[%c0, %c0_0, %c0_1] : memref<1x2x128xf32, #tpu.memory_space<vmem>>, vector<1x2x128xf32>
    %cst = arith.constant dense<0.000000e+00> : vector<1xf32>
    %1 = vector.multi_reduction <add>, %0, %cst [1, 2] : vector<1x2x128xf32> to vector<1xf32>
    %2 = vector.shape_cast %1 : vector<1xf32> to vector<1x1x1xf32>
    %cst_2 = arith.constant 3.906250e-03 : f32
    %3 = vector.broadcast %cst_2 : f32 to vector<1x1x1xf32>
    %4 = arith.mulf %2, %3 : vector<1x1x1xf32>
    %5 = vector.broadcast %4 : vector<1x1x1xf32> to vector<1x2x128xf32>
    %6 = arith.subf %0, %5 : vector<1x2x128xf32>
    %7 = arith.mulf %6, %6 : vector<1x2x128xf32>
    %cst_3 = arith.constant dense<0.000000e+00> : vector<1xf32>
    %8 = vector.multi_reduction <add>, %7, %cst_3 [1, 2] : vector<1x2x128xf32> to vector<1xf32>
    %9 = vector.shape_cast %8 : vector<1xf32> to vector<1x1x1xf32>
    %cst_4 = arith.constant 0.00392156886 : f32
    %10 = vector.broadcast %cst_4 : f32 to vector<1x1x1xf32>
    %11 = arith.mulf %9, %10 : vector<1x1x1xf32>
    %12 = math.rsqrt %11 : vector<1x1x1xf32>
    %13 = vector.broadcast %12 : vector<1x1x1xf32> to vector<1x2x128xf32>
    %14 = arith.mulf %6, %13 : vector<1x2x128xf32>
    %c0_5 = arith.constant 0 : index
    %c0_6 = arith.constant 0 : index
    %c0_7 = arith.constant 0 : index
    %15 = vector.load %arg2[%c0_5, %c0_6, %c0_7] : memref<1x2x128xf32, #tpu.memory_space<vmem>>, vector<1x2x128xf32>
    tpu.vector_store %arg2[%c0_5, %c0_6, %c0_7], %14 {strides = array<i32>} : memref<1x2x128xf32, #tpu.memory_space<vmem>>, vector<1x2x128xf32>,
    return
  }
  func.func @transform_0(%arg0: i32) -> (i32, i32, i32) {
    %c0_i32 = arith.constant 0 : i32
    %c0_i32_0 = arith.constant 0 : i32
    %c0_i32_1 = arith.constant 0 : i32
    return %arg0, %c0_i32, %c0_i32_0 : i32, i32, i32
  }
  func.func @transform_1(%arg0: i32) -> (i32, i32, i32) {
    %c0_i32 = arith.constant 0 : i32
    %c0_i32_0 = arith.constant 0 : i32
    %c0_i32_1 = arith.constant 0 : i32
    return %arg0, %c0_i32, %c0_i32_0 : i32, i32, i32
  }
}

</mosaic_0001>

<llo_original>
// kernel: tpu_custom_call.1
$region0: #{tpu_custom_call.1}
  #allocation0 [shape = 'u32[]', space=smem, size = 0x4, offset = 0x4, fixed_abs, tag = 'smem constant byte address 0x4 - core index']
  #allocation1 [shape = 'u32[144,128]{1,0:T(1,128)}', space=vmem, size = 0x12000, scoped, tag = 'internal scratch']
  %s0 = inlined_call_operand.hbm [shape: f32[4,2,128], index: 0, kind: input, shape index: {}]
  %s1 = inlined_call_operand.hbm [shape: f32[4,2,128], index: 1, kind: output, shape index: {}]
  %s2 = sld [smem:[#allocation0]]
  $region41: #{tpu_custom_call.1} parent=0
    _
  %s4 = ssub.s32 1, %s2
  %s5 = scalar_select 0, %s4, %s2
  $region1: #{tpu_custom_call.1} parent=0
    #allocation2 [shape = 'u8[2048]{0}', space=vmem, size = 0x800, scoped, tag = 'input window, operand 0']
    #allocation3 [shape = 's32[2]{0}', space=sflag, size = 0x8, scoped, tag = 'scoped memory for tpu_custom_call.1']
    #allocation4 [shape = 's32[2]{0}', space=sflag, size = 0x8, scoped, tag = 'scoped memory for tpu_custom_call.1']
    #allocation5 [shape = 'u8[2048]{0}', space=vmem, size = 0x800, scoped, tag = 'output window, operand 0']
    %6 = vsyncpa [#allocation3], 0
    %s7 = scalar_lea.sflag [#allocation3], 1
    %8 = vsyncpa %s7, 0
    %9 = vsyncpa [#allocation4], 0
    %s10 = scalar_lea.sflag [#allocation4], 1
    %11 = vsyncpa %s10, 0
    loop: start=0, step=1, limit=6
    $region2: #{tpu_custom_call.1} parent=1 // loop_pre_header
      _
    $region3: #{tpu_custom_call.1} parent=1 // loop_header
      %s13 = sphi 0, %s17
      %p14 = scmp.ge.s32.totalorder %s13, 6
      %s23 = sphi 0, %s25
      %s26 = sphi 0, %s23
      %s27 = sphi 0, %s26
      %s43 = sphi 0, %s27
      %s49 = sphi 0, %s51
      %s52 = sphi 0, %s49
      %s53 = sphi 0, %s52
      %s69 = sphi 0, %s53
    $region4: #{tpu_custom_call.1} parent=1 // loop_header_branch
      %16 = sbr.rel (%p14) target = $region8
    $region5: #{tpu_custom_call.1} parent=1 // loop_body
      %s18 = ssub.s32 %s13, 1
      %s19 = ssub.s32 %s13, 2
      %s20 = sadd.s32 %s13, 1
      %s21 = ssub.s32 %s13, %s20
      %p22 = scmp.eq.s32.totalorder %s21, 0
      %s24 = sadd.s32 %s23, 1
      %s25 = scalar_select %p22, %s23, %s24
      %p28 = pneg %p22
      %p29 = scmp.eq.s32.totalorder %s13, 3
      %p30 = por %p28, %p29
      %p31 = scmp.ne.s32.totalorder %s23, %s26
      %p32 = scmp.eq.s32.totalorder %s13, 0
      %p33 = por %p31, %p32
      %p34 = scmp.ne.s32.totalorder %s23, %s26
      %p35 = scmp.eq.s32.totalorder %s18, 3
      %p36 = por %p34, %p35
      %p37 = scmp.ne.s32.totalorder %s26, %s27
      %p38 = scmp.eq.s32.totalorder %s18, 0
      %p39 = por %p37, %p38
      %p40 = scmp.ne.s32.totalorder %s26, %s27
      %p41 = scmp.eq.s32.totalorder %s19, 3
      %p42 = por %p40, %p41
      %p44 = scmp.ne.s32.totalorder %s27, %s43
      %p45 = scmp.eq.s32.totalorder %s19, 0
      %p46 = por %p44, %p45
      %s47 = ssub.s32 %s13, %s20
      %p48 = scmp.eq.s32.totalorder %s47, 0
      %s50 = sadd.s32 %s49, 1
      %s51 = scalar_select %p48, %s49, %s50
      %p54 = pneg %p48
      %p55 = scmp.eq.s32.totalorder %s13, 3
      %p56 = por %p54, %p55
      %p57 = scmp.ne.s32.totalorder %s49, %s52
      %p58 = scmp.eq.s32.totalorder %s13, 0
      %p59 = por %p57, %p58
      %p60 = scmp.ne.s32.totalorder %s49, %s52
      %p61 = scmp.eq.s32.totalorder %s18, 3
      %p62 = por %p60, %p61
      %p63 = scmp.ne.s32.totalorder %s52, %s53
      %p64 = scmp.eq.s32.totalorder %s18, 0
      %p65 = por %p63, %p64
      %p66 = scmp.ne.s32.totalorder %s52, %s53
      %p67 = scmp.eq.s32.totalorder %s19, 3
      %p68 = por %p66, %p67
      %p70 = scmp.ne.s32.totalorder %s53, %s69
      %p71 = scmp.eq.s32.totalorder %s19, 0
      %p72 = por %p70, %p71
      %p73 = scmp.le.s32.totalorder 1, %s13
      %p74 = scmp.lt.s32.totalorder %s13, 5
      %p75 = pnand %p73, %p74
      %p76 = pneg %p75
      // Predicated region
      $region9: #{tpu_custom_call.1} parent=5 // pred_check
        _
      $region10: #{tpu_custom_call.1} parent=5 // pred_check_branch
        %78 = sbr.rel (%p75) target = $region12
      $region11: #{tpu_custom_call.1} parent=5 // pred_region
        %s79 = ssub.s32 %s13, 1
      $region12: #{tpu_custom_call.1} parent=5 // pred_fallthru
        _
      %p80 = scmp.lt.s32.totalorder %s13, 4
      // Predicated region
      $region13: #{tpu_custom_call.1} parent=5 // pred_check
        %p81 = pneg %p80
      $region14: #{tpu_custom_call.1} parent=5 // pred_check_branch
        %83 = sbr.rel (%p81) target = $region16
      $region15: #{tpu_custom_call.1} parent=5 // pred_region
        // Predicated region
        $region17: #{tpu_custom_call.1} parent=15 // pred_check
          %p84 = pneg %p33
        $region18: #{tpu_custom_call.1} parent=15 // pred_check_branch
          %86 = sbr.rel (%p84) target = $region20
        $region19: #{tpu_custom_call.1} parent=15 // pred_region
          %s87 = sand.u32 %s23, 1
          %s88 = scalar_lea.sflag [#allocation3], %s87
          %s89 = sand.u32 %s23, 1
          %s90 = smul.addr %s89, 2
          %s91 = scalar_lea.vmem [#allocation2], %s90
          %s93 = ssub.s32 32, 32
          %94 = vsyncadd %s88, %s93
          %s95 = smul.addr %s13, 32
          %s96 = scalar_lea.hbm %s0, %s95
          %s98 = sshll.u32 %s91, 4
          %s99 = int_to_ptr.vmem [resolvable:$true] %s98
          %101 = dma.hbm_to_vmem [thread:$0]  %s96, 32, %s99, %s88
        $region20: #{tpu_custom_call.1} parent=15 // pred_fallthru
          _
      $region16: #{tpu_custom_call.1} parent=5 // pred_fallthru
        _
      %p102 = scmp.le.s32.totalorder 1, %s13
      %p103 = scmp.lt.s32.totalorder %s13, 5
      %p104 = pnand %p102, %p103
      %p105 = pneg %p104
      // Predicated region
      $region21: #{tpu_custom_call.1} parent=5 // pred_check
        _
      $region22: #{tpu_custom_call.1} parent=5 // pred_check_branch
        %107 = sbr.rel (%p104) target = $region24
      $region23: #{tpu_custom_call.1} parent=5 // pred_region
        %s108 = ssub.s32 %s13, 1
        %s109 = sand.u32 %s26, 1
        %s110 = scalar_lea.sflag [#allocation3], %s109
        %s111 = sand.u32 %s26, 1
        %s112 = smul.addr %s111, 2
        %s113 = scalar_lea.vmem [#allocation2], %s112
        // Predicated region
        $region25: #{tpu_custom_call.1} parent=23 // pred_check
          %p114 = pneg %p39
        $region26: #{tpu_custom_call.1} parent=23 // pred_check_branch
          %116 = sbr.rel (%p114) target = $region28
        $region27: #{tpu_custom_call.1} parent=23 // pred_region
          %117 = dma.done %s110, 32
        $region28: #{tpu_custom_call.1} parent=23 // pred_fallthru
          _
        %s118 = sand.u32 %s26, 1
        %s119 = scalar_lea.sflag [#allocation3], %s118
        %s120 = sand.u32 %s26, 1
        %s121 = smul.addr %s120, 2
        %s122 = scalar_lea.vmem [#allocation2], %s121
        %p123 = pneg %p39
        %p124 = pneg %p36
        %p125 = pneg %p65
        %p126 = pneg %p62
        %s127 = sand.u32 %s52, 1
        %s128 = scalar_lea.sflag [#allocation4], %s127
        %s129 = sand.u32 %s52, 1
        %s130 = smul.addr %s129, 2
        %s131 = scalar_lea.vmem [#allocation5], %s130
        %v132 = vld [vmem:[%s113] sm:$0x3]
        %vm133 = vcmask 1041408
        %v134 = vsel %vm133, %v132, 0.0
        %135 = vadd.xlane.f32.xlu0 %v134
        %v136 = vpop.xlane.xlu0 %135
        %v137 = vrot.slane %v136, 4
        %v138 = vadd.f32 %v136, %v137
        %v139 = vrot.slane %v138, 2
        %v140 = vadd.f32 %v138, %v139
        %v141 = vrot.slane %v140, 1
        %v142 = vadd.f32 %v140, %v141
        %v143 = vmul.f32 %v142, 0.00390625
        %v144 = vsub.f32 %v132, %v143
        %v145 = vmul.f32 %v144, %v144
        %v146 = vsel %vm133, %v145, 0.0
        %147 = vadd.xlane.f32.xlu0 %v146
        %v148 = vpop.xlane.xlu0 %147
        %v149 = vrot.slane %v148, 4
        %v150 = vadd.f32 %v148, %v149
        %v151 = vrot.slane %v150, 2
        %v152 = vadd.f32 %v150, %v151
        %v153 = vrot.slane %v152, 1
        %v154 = vadd.f32 %v152, %v153
        %v155 = vmul.f32 %v154, 0.003921569
        %v156 = vrsqrt.pop %v155
        %v157 = vmul.f32 %v144, %v156
        %158 = vst [vmem:[%s131] sm:$0x3] %v157
        %s159 = sand.u32 %s52, 1
        %s160 = scalar_lea.sflag [#allocation4], %s159
        %s161 = sand.u32 %s52, 1
        %s162 = smul.addr %s161, 2
        %s163 = scalar_lea.vmem [#allocation5], %s162
        // Predicated region
        $region29: #{tpu_custom_call.1} parent=23 // pred_check
          %p164 = pneg %p62
        $region30: #{tpu_custom_call.1} parent=23 // pred_check_branch
          %166 = sbr.rel (%p164) target = $region32
        $region31: #{tpu_custom_call.1} parent=23 // pred_region
          %s168 = ssub.s32 32, 32
          %169 = vsyncadd %s160, %s168
          %s170 = smul.addr %s18, 32
          %s171 = scalar_lea.hbm %s1, %s170
          %s173 = sshll.u32 %s163, 4
          %s174 = int_to_ptr.vmem [resolvable:$true] %s173
          %176 = dma.vmem_to_hbm [thread:$0]  %s174, 32, %s171, %s160
        $region32: #{tpu_custom_call.1} parent=23 // pred_fallthru
          _
      $region24: #{tpu_custom_call.1} parent=5 // pred_fallthru
        _
      %p177 = scmp.le.s32.totalorder 2, %s13
      // Predicated region
      $region33: #{tpu_custom_call.1} parent=5 // pred_check
        %p178 = pneg %p177
      $region34: #{tpu_custom_call.1} parent=5 // pred_check_branch
        %180 = sbr.rel (%p178) target = $region36
      $region35: #{tpu_custom_call.1} parent=5 // pred_region
        %s181 = ssub.s32 %s13, 2
        // Predicated region
        $region37: #{tpu_custom_call.1} parent=35 // pred_check
          %p182 = pneg %p68
        $region38: #{tpu_custom_call.1} parent=35 // pred_check_branch
          %184 = sbr.rel (%p182) target = $region40
        $region39: #{tpu_custom_call.1} parent=35 // pred_region
          %s185 = sand.u32 %s53, 1
          %s186 = scalar_lea.sflag [#allocation4], %s185
          %s187 = sand.u32 %s53, 1
          %s188 = smul.addr %s187, 2
          %s189 = scalar_lea.vmem [#allocation5], %s188
          %190 = dma.done %s186, 32
        $region40: #{tpu_custom_call.1} parent=35 // pred_fallthru
          _
      $region36: #{tpu_custom_call.1} parent=5 // pred_fallthru
        _
    $region6: #{tpu_custom_call.1} parent=1 // loop_footer
      %s17 = sadd.s32 1, %s13
    $region7: #{tpu_custom_call.1} parent=1 // loop_footer_branch
      %12 = sbr.rel target = $region3
    $region8: #{tpu_custom_call.1} parent=1 // loop_exit
      _
    %191 = vsyncpa [#allocation3], 1
    %s192 = scalar_lea.sflag [#allocation3], 1
    %193 = vsyncpa %s192, 1
    %194 = vsyncpa [#allocation4], 1
    %s195 = scalar_lea.sflag [#allocation4], 1
    %196 = vsyncpa %s195, 1

</llo_original>
